<compile_context>
chip_gen: v7x
topology: tpu7x:2x2x1
jax: 0.10.0
libtpu: 0.0.40
codegen_flags: <defaults>
</compile_context>

<pallas_src>
import functools

import jax
import jax.numpy as jnp
import numpy as np
from jax import lax
from jax.experimental import pallas as pl
from jax.experimental.pallas import tpu as pltpu

DIM = 4
HIDDEN = 32
NUM_HIDDEN1 = 2
NUM_HIDDEN2 = 2
BATCH = 8
BN_EPS = 1e-5
LANES = 128        # lane width of the parameter slab / final output space


def _round_up(n, m):
    return ((n + m - 1) // m) * m


def _build_layout(dim, hidden, n1, n2):
    """Row offsets of every parameter inside the packed [rows, 128] slab."""
    off = {}
    r = 0

    def add(name, nrows):
        nonlocal r
        off[name] = r
        r += nrows

    # --- single-row "vector" section (biases / BN affine / noise rows) ---
    for name in (["b_in", "w_in_n", "bn_gamma", "bn_beta"]
                 + [f"b1_{l}" for l in range(n1)]
                 + ["w_mid_n", "b_mid"]
                 + [f"b2_{l}" for l in range(n2)]
                 + ["w_out_n", "b_out"]):
        add(name, 1)
    r = _round_up(r, 8)                 # align matrix blocks to sublane tiles

    # --- matrix section: x-rows of lin_in, then 32-row square blocks ---
    add("w_in_x", _round_up(dim, 8))    # rows 0..dim-1 used (read row-by-row)
    for l in range(n1):
        add(f"w1_{l}", hidden)
    add("w_mid_x", hidden)
    for l in range(n2):
        add(f"w2_{l}", hidden)
    add("w_out_x", hidden)              # lanes 0..dim-1 used (lane-dense out)
    return off, _round_up(r, 8)


_OFF, _TOTAL_ROWS = _build_layout(DIM, HIDDEN, NUM_HIDDEN1, NUM_HIDDEN2)


def _toy_model_kernel(x_ref, n_ref, p_ref, o_ref, *, off, dim, hidden, n1, n2):
    f32 = jnp.float32
    H = hidden

    def vrow(name):                      # [1, H] static row slice (hidden lanes)
        r0 = off[name]
        return p_ref[r0:r0 + 1, :H]

    def sq(name):                        # [H, H] static square-weight block
        r0 = off[name]
        return p_ref[r0:r0 + H, :H]

    n = n_ref[...]                       # [B, 1]

    # lin_in on the VPU: b_in + n * w_in_noise_row + sum_k x[:,k] * w_in_row_k
    h = n * vrow("w_in_n") + vrow("b_in")                       # [B, H]
    r_in = off["w_in_x"]
    for k in range(dim):                                        # dim=4, unrolled
        h = h + x_ref[:, k:k + 1] * p_ref[r_in + k:r_in + k + 1, :H]
    h = jnp.maximum(h, 0.0)

    # BatchNorm1d (training-mode batch statistics, biased variance, stable
    # two-pass form); affine folded into a single scale/shift FMA, rsqrt -> EUP.
    mean = jnp.mean(h, axis=0, keepdims=True)
    d = h - mean
    var = jnp.mean(d * d, axis=0, keepdims=True)
    h = d * (vrow("bn_gamma") * lax.rsqrt(var + BN_EPS)) + vrow("bn_beta")

    # inner_layers1: K=32 matmuls against 32-row weight blocks
    for l in range(n1):
        h = jnp.dot(h, sq(f"w1_{l}"), preferred_element_type=f32) + vrow(f"b1_{l}")
        h = jnp.maximum(h, 0.0)

    # middle_layer on cat(h, noise): noise column on the VPU, gated relu(m)*m
    m = (jnp.dot(h, sq("w_mid_x"), preferred_element_type=f32)
         + n * vrow("w_mid_n") + vrow("b_mid"))
    h = jnp.maximum(m, 0.0) * m

    # inner_layers2
    for l in range(n2):
        h = jnp.dot(h, sq(f"w2_{l}"), preferred_element_type=f32) + vrow(f"b2_{l}")
        h = jnp.maximum(h, 0.0)

    # lin_out on cat(h, noise): expand to the 128-lane space for a lane-dense
    # [B, 128] store (columns >= dim are exactly zero; wrapper slices them off).
    r_out = off["w_out_x"]
    r_on, r_ob = off["w_out_n"], off["b_out"]
    o = (jnp.dot(h, p_ref[r_out:r_out + H, :], preferred_element_type=f32)
         + n * p_ref[r_on:r_on + 1, :] + p_ref[r_ob:r_ob + 1, :])
    o_ref[...] = o.astype(o_ref.dtype)


@jax.jit
def toy_conditional_model(x, noise_labels, param_slab):
    b, dim = x.shape
    n_col = noise_labels[:, None].astype(jnp.float32)            # [B, 1]

    kernel = functools.partial(_toy_model_kernel, off=_OFF, dim=DIM,
                               hidden=HIDDEN, n1=NUM_HIDDEN1, n2=NUM_HIDDEN2)
    vmem = pl.BlockSpec(memory_space=pltpu.MemorySpace.VMEM)
    out = pl.pallas_call(
        kernel,
        out_shape=jax.ShapeDtypeStruct((b, LANES), jnp.float32),
        in_specs=[vmem, vmem, vmem],
        out_specs=vmem,
    )(x.astype(jnp.float32), n_col, param_slab)
    return out[:, :dim]


def init_params(key):
    """PyTorch-style (uniform +-1/sqrt(fan_in)) raw parameters."""
    dim, hidden, n1, n2 = DIM, HIDDEN, NUM_HIDDEN1, NUM_HIDDEN2
    ks = jax.random.split(key, 5)

    def lin(k, fan_in, fan_out, leading=()):
        bound = 1.0 / np.sqrt(fan_in)
        kw, kb = jax.random.split(k)
        w = jax.random.uniform(kw, leading + (fan_in, fan_out),
                               jnp.float32, -bound, bound)
        b = jax.random.uniform(kb, leading + (fan_out,),
                               jnp.float32, -bound, bound)
        return w, b

    w_in, b_in = lin(ks[0], dim + 1, hidden)
    w_mid, b_mid = lin(ks[1], hidden + 1, hidden)
    w_out, b_out = lin(ks[2], hidden + 1, dim)       # is_energy == False
    w1, b1 = lin(ks[3], hidden, hidden, leading=(n1,))
    w2, b2 = lin(ks[4], hidden, hidden, leading=(n2,))

    return {
        "w_in": w_in, "b_in": b_in,
        "bn_gamma": jnp.ones((hidden,), jnp.float32),
        "bn_beta": jnp.zeros((hidden,), jnp.float32),
        "w1": w1, "b1": b1,
        "w_mid": w_mid, "b_mid": b_mid,
        "w2": w2, "b2": b2,
        "w_out": w_out, "b_out": b_out,
    }


def pack_params(raw):
    """Pack all parameters into one lane-padded [216, 128] f32 slab.

    Padding regions are zero-initialized; since the kernel only ever reads the
    first `hidden` lanes of the hidden-path blocks, no zero-lane hygiene
    invariant beyond "unwritten slab entries are zero" is required.
    """
    hidden, n1, n2 = HIDDEN, NUM_HIDDEN1, NUM_HIDDEN2
    slab = np.zeros((_TOTAL_ROWS, LANES), np.float32)

    def put_row(name, v):
        v = np.asarray(v, np.float32)
        slab[_OFF[name], :v.shape[0]] = v

    def put_block(name, m):
        m = np.asarray(m, np.float32)
        r0 = _OFF[name]
        slab[r0:r0 + m.shape[0], :m.shape[1]] = m

    put_row("b_in", raw["b_in"])
    put_row("w_in_n", raw["w_in"][DIM])           # noise row of lin_in
    put_row("bn_gamma", raw["bn_gamma"])
    put_row("bn_beta", raw["bn_beta"])
    for l in range(n1):
        put_row(f"b1_{l}", raw["b1"][l])
    put_row("w_mid_n", raw["w_mid"][hidden])      # noise row of middle layer
    put_row("b_mid", raw["b_mid"])
    for l in range(n2):
        put_row(f"b2_{l}", raw["b2"][l])
    put_row("w_out_n", raw["w_out"][hidden])      # noise row of lin_out
    put_row("b_out", raw["b_out"])

    put_block("w_in_x", raw["w_in"][:DIM])        # (dim, hidden)
    for l in range(n1):
        put_block(f"w1_{l}", raw["w1"][l])
    put_block("w_mid_x", raw["w_mid"][:hidden])
    for l in range(n2):
        put_block(f"w2_{l}", raw["w2"][l])
    put_block("w_out_x", raw["w_out"][:hidden])
    return jnp.asarray(slab)


def reference_forward(x, noise_labels, p):
    """Pure-JAX reference mirroring the PyTorch forward."""
    n = noise_labels[:, None]
    h = jnp.concatenate([x, n], axis=1) @ p["w_in"] + p["b_in"]
    h = jnp.maximum(h, 0.0)
    mean = jnp.mean(h, axis=0, keepdims=True)
    var = jnp.mean((h - mean) ** 2, axis=0, keepdims=True)
    h = (h - mean) / jnp.sqrt(var + BN_EPS) * p["bn_gamma"] + p["bn_beta"]
    for l in range(p["w1"].shape[0]):
        h = jnp.maximum(h @ p["w1"][l] + p["b1"][l], 0.0)
    m = jnp.concatenate([h, n], axis=1) @ p["w_mid"] + p["b_mid"]
    h = jnp.maximum(m, 0.0) * m
    for l in range(p["w2"].shape[0]):
        h = jnp.maximum(h @ p["w2"][l] + p["b2"][l], 0.0)
    return jnp.concatenate([h, n], axis=1) @ p["w_out"] + p["b_out"]


if __name__ == "__main__":
    key = jax.random.PRNGKey(0)
    k_x, k_n, k_p = jax.random.split(key, 3)

    x = jax.random.normal(k_x, (BATCH, DIM), jnp.float32)
    noise_labels = jax.random.uniform(k_n, (BATCH,), jnp.float32)
    raw = init_params(k_p)
    slab = pack_params(raw)

    out = toy_conditional_model(x, noise_labels, slab)
    out = jax.block_until_ready(out)

    ref = reference_forward(x, noise_labels, raw)
    np.testing.assert_allclose(np.asarray(out), np.asarray(ref),
                               rtol=1e-4, atol=1e-4)
    print("KERNEL_OK")
</pallas_src>

<mosaic_0001>
module attributes {stable_mosaic.version = 11 : i64} {
  func.func @_toy_model_kernel(%arg0: memref<8x4xf32, #tpu.memory_space<vmem>>, %arg1: memref<8x1xf32, #tpu.memory_space<vmem>>, %arg2: memref<216x128xf32, #tpu.memory_space<vmem>>, %arg3: memref<8x128xf32, #tpu.memory_space<vmem>>) attributes {dimension_semantics = [], scalar_prefetch = 0 : i64, scratch_operands = 0 : i64, tpu.core_type = #tpu.core_type<tc>} {
    %c0 = arith.constant 0 : index
    %c0_0 = arith.constant 0 : index
    %0 = vector.load %arg1[%c0, %c0_0] : memref<8x1xf32, #tpu.memory_space<vmem>>, vector<8x1xf32>
    %c1 = arith.constant 1 : index
    %c0_1 = arith.constant 0 : index
    %1 = vector.load %arg2[%c1, %c0_1] : memref<216x128xf32, #tpu.memory_space<vmem>>, vector<1x32xf32>
    %2 = vector.broadcast %0 : vector<8x1xf32> to vector<8x32xf32>
    %3 = vector.broadcast %1 : vector<1x32xf32> to vector<8x32xf32>
    %4 = arith.mulf %2, %3 : vector<8x32xf32>
    %c0_2 = arith.constant 0 : index
    %c0_3 = arith.constant 0 : index
    %5 = vector.load %arg2[%c0_2, %c0_3] : memref<216x128xf32, #tpu.memory_space<vmem>>, vector<1x32xf32>
    %6 = vector.broadcast %5 : vector<1x32xf32> to vector<8x32xf32>
    %7 = arith.addf %4, %6 : vector<8x32xf32>
    %c0_4 = arith.constant 0 : index
    %c0_5 = arith.constant 0 : index
    %8 = vector.load %arg0[%c0_4, %c0_5] : memref<8x4xf32, #tpu.memory_space<vmem>>, vector<8x1xf32>
    %c16 = arith.constant 16 : index
    %c0_6 = arith.constant 0 : index
    %9 = vector.load %arg2[%c16, %c0_6] : memref<216x128xf32, #tpu.memory_space<vmem>>, vector<1x32xf32>
    %10 = vector.broadcast %8 : vector<8x1xf32> to vector<8x32xf32>
    %11 = vector.broadcast %9 : vector<1x32xf32> to vector<8x32xf32>
    %12 = arith.mulf %10, %11 : vector<8x32xf32>
    %13 = arith.addf %7, %12 : vector<8x32xf32>
    %c0_7 = arith.constant 0 : index
    %c1_8 = arith.constant 1 : index
    %14 = vector.load %arg0[%c0_7, %c1_8] : memref<8x4xf32, #tpu.memory_space<vmem>>, vector<8x1xf32>
    %c17 = arith.constant 17 : index
    %c0_9 = arith.constant 0 : index
    %15 = vector.load %arg2[%c17, %c0_9] : memref<216x128xf32, #tpu.memory_space<vmem>>, vector<1x32xf32>
    %16 = vector.broadcast %14 : vector<8x1xf32> to vector<8x32xf32>
    %17 = vector.broadcast %15 : vector<1x32xf32> to vector<8x32xf32>
    %18 = arith.mulf %16, %17 : vector<8x32xf32>
    %19 = arith.addf %13, %18 : vector<8x32xf32>
    %c0_10 = arith.constant 0 : index
    %c2 = arith.constant 2 : index
    %20 = vector.load %arg0[%c0_10, %c2] : memref<8x4xf32, #tpu.memory_space<vmem>>, vector<8x1xf32>
    %c18 = arith.constant 18 : index
    %c0_11 = arith.constant 0 : index
    %21 = vector.load %arg2[%c18, %c0_11] : memref<216x128xf32, #tpu.memory_space<vmem>>, vector<1x32xf32>
    %22 = vector.broadcast %20 : vector<8x1xf32> to vector<8x32xf32>
    %23 = vector.broadcast %21 : vector<1x32xf32> to vector<8x32xf32>
    %24 = arith.mulf %22, %23 : vector<8x32xf32>
    %25 = arith.addf %19, %24 : vector<8x32xf32>
    %c0_12 = arith.constant 0 : index
    %c3 = arith.constant 3 : index
    %26 = vector.load %arg0[%c0_12, %c3] : memref<8x4xf32, #tpu.memory_space<vmem>>, vector<8x1xf32>
    %c19 = arith.constant 19 : index
    %c0_13 = arith.constant 0 : index
    %27 = vector.load %arg2[%c19, %c0_13] : memref<216x128xf32, #tpu.memory_space<vmem>>, vector<1x32xf32>
    %28 = vector.broadcast %26 : vector<8x1xf32> to vector<8x32xf32>
    %29 = vector.broadcast %27 : vector<1x32xf32> to vector<8x32xf32>
    %30 = arith.mulf %28, %29 : vector<8x32xf32>
    %31 = arith.addf %25, %30 : vector<8x32xf32>
    %cst = arith.constant 0.000000e+00 : f32
    %32 = vector.broadcast %cst : f32 to vector<8x32xf32>
    %33 = arith.maximumf %31, %32 : vector<8x32xf32>
    %cst_14 = arith.constant dense<0.000000e+00> : vector<32xf32>
    %34 = vector.multi_reduction <add>, %33, %cst_14 [0] : vector<8x32xf32> to vector<32xf32>
    %35 = vector.shape_cast %34 : vector<32xf32> to vector<1x32xf32>
    %cst_15 = arith.constant 8.000000e+00 : f32
    %36 = vector.broadcast %cst_15 : f32 to vector<1x32xf32>
    %37 = arith.divf %35, %36 : vector<1x32xf32>
    %38 = vector.broadcast %37 : vector<1x32xf32> to vector<8x32xf32>
    %39 = arith.subf %33, %38 : vector<8x32xf32>
    %40 = arith.mulf %39, %39 : vector<8x32xf32>
    %cst_16 = arith.constant dense<0.000000e+00> : vector<32xf32>
    %41 = vector.multi_reduction <add>, %40, %cst_16 [0] : vector<8x32xf32> to vector<32xf32>
    %42 = vector.shape_cast %41 : vector<32xf32> to vector<1x32xf32>
    %cst_17 = arith.constant 8.000000e+00 : f32
    %43 = vector.broadcast %cst_17 : f32 to vector<1x32xf32>
    %44 = arith.divf %42, %43 : vector<1x32xf32>
    %c2_18 = arith.constant 2 : index
    %c0_19 = arith.constant 0 : index
    %45 = vector.load %arg2[%c2_18, %c0_19] : memref<216x128xf32, #tpu.memory_space<vmem>>, vector<1x32xf32>
    %cst_20 = arith.constant 9.99999974E-6 : f32
    %46 = vector.broadcast %cst_20 : f32 to vector<1x32xf32>
    %47 = arith.addf %44, %46 : vector<1x32xf32>
    %48 = math.rsqrt %47 : vector<1x32xf32>
    %49 = arith.mulf %45, %48 : vector<1x32xf32>
    %50 = vector.broadcast %49 : vector<1x32xf32> to vector<8x32xf32>
    %51 = arith.mulf %39, %50 : vector<8x32xf32>
    %c3_21 = arith.constant 3 : index
    %c0_22 = arith.constant 0 : index
    %52 = vector.load %arg2[%c3_21, %c0_22] : memref<216x128xf32, #tpu.memory_space<vmem>>, vector<1x32xf32>
    %53 = vector.broadcast %52 : vector<1x32xf32> to vector<8x32xf32>
    %54 = arith.addf %51, %53 : vector<8x32xf32>
    %c24 = arith.constant 24 : index
    %c0_23 = arith.constant 0 : index
    %55 = vector.load %arg2[%c24, %c0_23] : memref<216x128xf32, #tpu.memory_space<vmem>>, vector<32x32xf32>
    %cst_24 = arith.constant dense<0.000000e+00> : vector<8x32xf32>
    %56 = tpu.matmul %54, %55, %cst_24 {dimension_numbers = #tpu.dot_dimension_numbers<[1], [0], [0], [1], [0, 0, 1, 1], [], []>} : vector<8x32xf32>, vector<32x32xf32>, vector<8x32xf32> -> vector<8x32xf32>
    %c4 = arith.constant 4 : index
    %c0_25 = arith.constant 0 : index
    %57 = vector.load %arg2[%c4, %c0_25] : memref<216x128xf32, #tpu.memory_space<vmem>>, vector<1x32xf32>
    %58 = vector.broadcast %57 : vector<1x32xf32> to vector<8x32xf32>
    %59 = arith.addf %56, %58 : vector<8x32xf32>
    %cst_26 = arith.constant 0.000000e+00 : f32
    %60 = vector.broadcast %cst_26 : f32 to vector<8x32xf32>
    %61 = arith.maximumf %59, %60 : vector<8x32xf32>
    %c56 = arith.constant 56 : index
    %c0_27 = arith.constant 0 : index
    %62 = vector.load %arg2[%c56, %c0_27] : memref<216x128xf32, #tpu.memory_space<vmem>>, vector<32x32xf32>
    %cst_28 = arith.constant dense<0.000000e+00> : vector<8x32xf32>
    %63 = tpu.matmul %61, %62, %cst_28 {dimension_numbers = #tpu.dot_dimension_numbers<[1], [0], [0], [1], [0, 0, 1, 1], [], []>} : vector<8x32xf32>, vector<32x32xf32>, vector<8x32xf32> -> vector<8x32xf32>
    %c5 = arith.constant 5 : index
    %c0_29 = arith.constant 0 : index
    %64 = vector.load %arg2[%c5, %c0_29] : memref<216x128xf32, #tpu.memory_space<vmem>>, vector<1x32xf32>
    %65 = vector.broadcast %64 : vector<1x32xf32> to vector<8x32xf32>
    %66 = arith.addf %63, %65 : vector<8x32xf32>
    %cst_30 = arith.constant 0.000000e+00 : f32
    %67 = vector.broadcast %cst_30 : f32 to vector<8x32xf32>
    %68 = arith.maximumf %66, %67 : vector<8x32xf32>
    %c88 = arith.constant 88 : index
    %c0_31 = arith.constant 0 : index
    %69 = vector.load %arg2[%c88, %c0_31] : memref<216x128xf32, #tpu.memory_space<vmem>>, vector<32x32xf32>
    %cst_32 = arith.constant dense<0.000000e+00> : vector<8x32xf32>
    %70 = tpu.matmul %68, %69, %cst_32 {dimension_numbers = #tpu.dot_dimension_numbers<[1], [0], [0], [1], [0, 0, 1, 1], [], []>} : vector<8x32xf32>, vector<32x32xf32>, vector<8x32xf32> -> vector<8x32xf32>
    %c6 = arith.constant 6 : index
    %c0_33 = arith.constant 0 : index
    %71 = vector.load %arg2[%c6, %c0_33] : memref<216x128xf32, #tpu.memory_space<vmem>>, vector<1x32xf32>
    %72 = vector.broadcast %0 : vector<8x1xf32> to vector<8x32xf32>
    %73 = vector.broadcast %71 : vector<1x32xf32> to vector<8x32xf32>
    %74 = arith.mulf %72, %73 : vector<8x32xf32>
    %75 = arith.addf %70, %74 : vector<8x32xf32>
    %c7 = arith.constant 7 : index
    %c0_34 = arith.constant 0 : index
    %76 = vector.load %arg2[%c7, %c0_34] : memref<216x128xf32, #tpu.memory_space<vmem>>, vector<1x32xf32>
    %77 = vector.broadcast %76 : vector<1x32xf32> to vector<8x32xf32>
    %78 = arith.addf %75, %77 : vector<8x32xf32>
    %cst_35 = arith.constant 0.000000e+00 : f32
    %79 = vector.broadcast %cst_35 : f32 to vector<8x32xf32>
    %80 = arith.maximumf %78, %79 : vector<8x32xf32>
    %81 = arith.mulf %80, %78 : vector<8x32xf32>
    %c120 = arith.constant 120 : index
    %c0_36 = arith.constant 0 : index
    %82 = vector.load %arg2[%c120, %c0_36] : memref<216x128xf32, #tpu.memory_space<vmem>>, vector<32x32xf32>
    %cst_37 = arith.constant dense<0.000000e+00> : vector<8x32xf32>
    %83 = tpu.matmul %81, %82, %cst_37 {dimension_numbers = #tpu.dot_dimension_numbers<[1], [0], [0], [1], [0, 0, 1, 1], [], []>} : vector<8x32xf32>, vector<32x32xf32>, vector<8x32xf32> -> vector<8x32xf32>
    %c8 = arith.constant 8 : index
    %c0_38 = arith.constant 0 : index
    %84 = vector.load %arg2[%c8, %c0_38] : memref<216x128xf32, #tpu.memory_space<vmem>>, vector<1x32xf32>
    %85 = vector.broadcast %84 : vector<1x32xf32> to vector<8x32xf32>
    %86 = arith.addf %83, %85 : vector<8x32xf32>
    %cst_39 = arith.constant 0.000000e+00 : f32
    %87 = vector.broadcast %cst_39 : f32 to vector<8x32xf32>
    %88 = arith.maximumf %86, %87 : vector<8x32xf32>
    %c152 = arith.constant 152 : index
    %c0_40 = arith.constant 0 : index
    %89 = vector.load %arg2[%c152, %c0_40] : memref<216x128xf32, #tpu.memory_space<vmem>>, vector<32x32xf32>
    %cst_41 = arith.constant dense<0.000000e+00> : vector<8x32xf32>
    %90 = tpu.matmul %88, %89, %cst_41 {dimension_numbers = #tpu.dot_dimension_numbers<[1], [0], [0], [1], [0, 0, 1, 1], [], []>} : vector<8x32xf32>, vector<32x32xf32>, vector<8x32xf32> -> vector<8x32xf32>
    %c9 = arith.constant 9 : index
    %c0_42 = arith.constant 0 : index
    %91 = vector.load %arg2[%c9, %c0_42] : memref<216x128xf32, #tpu.memory_space<vmem>>, vector<1x32xf32>
    %92 = vector.broadcast %91 : vector<1x32xf32> to vector<8x32xf32>
    %93 = arith.addf %90, %92 : vector<8x32xf32>
    %cst_43 = arith.constant 0.000000e+00 : f32
    %94 = vector.broadcast %cst_43 : f32 to vector<8x32xf32>
    %95 = arith.maximumf %93, %94 : vector<8x32xf32>
    %c184 = arith.constant 184 : index
    %c0_44 = arith.constant 0 : index
    %96 = vector.load %arg2[%c184, %c0_44] : memref<216x128xf32, #tpu.memory_space<vmem>>, vector<32x128xf32>
    %cst_45 = arith.constant dense<0.000000e+00> : vector<8x128xf32>
    %97 = tpu.matmul %95, %96, %cst_45 {dimension_numbers = #tpu.dot_dimension_numbers<[1], [0], [0], [1], [0, 0, 1, 1], [], []>} : vector<8x32xf32>, vector<32x128xf32>, vector<8x128xf32> -> vector<8x128xf32>
    %c10 = arith.constant 10 : index
    %c0_46 = arith.constant 0 : index
    %98 = vector.load %arg2[%c10, %c0_46] : memref<216x128xf32, #tpu.memory_space<vmem>>, vector<1x128xf32>
    %99 = vector.broadcast %0 : vector<8x1xf32> to vector<8x128xf32>
    %100 = vector.broadcast %98 : vector<1x128xf32> to vector<8x128xf32>
    %101 = arith.mulf %99, %100 : vector<8x128xf32>
    %102 = arith.addf %97, %101 : vector<8x128xf32>
    %c11 = arith.constant 11 : index
    %c0_47 = arith.constant 0 : index
    %103 = vector.load %arg2[%c11, %c0_47] : memref<216x128xf32, #tpu.memory_space<vmem>>, vector<1x128xf32>
    %104 = vector.broadcast %103 : vector<1x128xf32> to vector<8x128xf32>
    %105 = arith.addf %102, %104 : vector<8x128xf32>
    %c0_48 = arith.constant 0 : index
    %c0_49 = arith.constant 0 : index
    %106 = vector.load %arg3[%c0_48, %c0_49] : memref<8x128xf32, #tpu.memory_space<vmem>>, vector<8x128xf32>
    tpu.vector_store %arg3[%c0_48, %c0_49], %105 {strides = array<i32>} : memref<8x128xf32, #tpu.memory_space<vmem>>, vector<8x128xf32>,
    return
  }
}

</mosaic_0001>

<llo_original>
// kernel: toy_conditional_model.1
$region0: #{toy_conditional_model.1}
  #allocation0 [shape = 'u32[]', space=smem, size = 0x4, offset = 0x4, fixed_abs, tag = 'smem constant byte address 0x4 - core index']
  #allocation1 [shape = 'u32[144,128]{1,0:T(1,128)}', space=vmem, size = 0x12000, scoped, tag = 'internal scratch']
  %s0 = inlined_call_operand.vmem [shape: f32[8,4], index: 0, kind: input, shape index: {}]
  %s1 = inlined_call_operand.vmem [shape: f32[8,1], index: 1, kind: input, shape index: {}]
  %s2 = inlined_call_operand.hbm [shape: f32[216,128], index: 2, kind: input, shape index: {}]
  %s3 = inlined_call_operand.vmem [shape: f32[8,128], index: 3, kind: output, shape index: {}]
  %s4 = sld [smem:[#allocation0]]
  $region26: #{toy_conditional_model.1} parent=0
    _
  %s6 = ssub.s32 1, %s4
  %s7 = scalar_select 0, %s6, %s4
  $region1: #{toy_conditional_model.1} parent=0
    #allocation2 [shape = 'u8[110592]{0}', space=vmem, size = 0x1b000, scoped, tag = 'input window, operand 2, single buffered']
    #allocation3 [shape = 's32[1]{0}', space=sflag, size = 0x4, scoped, tag = 'scoped memory for toy_conditional_model.1']
    %8 = vsyncpa [#allocation3], 0
    // Predicated region
    $region2: #{toy_conditional_model.1} parent=1 // pred_check
      _
    $region3: #{toy_conditional_model.1} parent=1 // pred_check_branch
      %10 = sbr.rel (0) target = $region5
    $region4: #{toy_conditional_model.1} parent=1 // pred_region
      _
    $region5: #{toy_conditional_model.1} parent=1 // pred_fallthru
      _
    // Predicated region
    $region6: #{toy_conditional_model.1} parent=1 // pred_check
      _
    $region7: #{toy_conditional_model.1} parent=1 // pred_check_branch
      %12 = sbr.rel (0) target = $region9
    $region8: #{toy_conditional_model.1} parent=1 // pred_region
      _
    $region9: #{toy_conditional_model.1} parent=1 // pred_fallthru
      _
    // Predicated region
    $region10: #{toy_conditional_model.1} parent=1 // pred_check
      _
    $region11: #{toy_conditional_model.1} parent=1 // pred_check_branch
      %14 = sbr.rel (0) target = $region13
    $region12: #{toy_conditional_model.1} parent=1 // pred_region
      %s16 = ssub.s32 3456, 3456
      %17 = vsyncadd [#allocation3], %s16
      %s18 = sshll.u32 [#allocation2], 4
      %s19 = int_to_ptr.vmem [resolvable:$true] %s18
      %24 = dma.hbm_to_vmem [thread:$0]  %s2, 3456, %s19, [#allocation3], 128, 128, 8
    $region13: #{toy_conditional_model.1} parent=1 // pred_fallthru
      _
    // Predicated region
    $region14: #{toy_conditional_model.1} parent=1 // pred_check
      _
    $region15: #{toy_conditional_model.1} parent=1 // pred_check_branch
      %26 = sbr.rel (0) target = $region17
    $region16: #{toy_conditional_model.1} parent=1 // pred_region
      %27 = dma.done [#allocation3], 3456
    $region17: #{toy_conditional_model.1} parent=1 // pred_fallthru
      _
    %v28 = vld [vmem:[%s1] sm:$0xff]
    %v29 = vld [vmem:[#allocation2 + $0x1] sm:$0x1]
    %31 = vset.pattern.permute.xlu0 0
    %32 = vperm.xlu0 %31, %v28
    %v33 = vpop.permute.xlu0 %32
    %v35 = vlaneseq
    %v36 = vshrl.u32 %v35, 7
    %v37 = vsub.s32 0, %v36
    %v38 = vrot.slane %v29, %v37
    %v39 = vmul.f32 %v33, %v38
    %v40 = vld [vmem:[#allocation2] sm:$0x1]
    %v41 = vlaneseq
    %v42 = vshrl.u32 %v41, 7
    %v43 = vsub.s32 0, %v42
    %v44 = vrot.slane %v40, %v43
    %v45 = vadd.f32 %v39, %v44
    %v46 = vld [vmem:[%s0] sm:$0xff]
    %v47 = vld [vmem:[#allocation2 + $0x10] sm:$0x1]
    %49 = vset.pattern.permute.xlu0 0
    %50 = vperm.xlu0 %49, %v46
    %v51 = vpop.permute.xlu0 %50
    %v53 = vlaneseq
    %v54 = vshrl.u32 %v53, 7
    %v55 = vsub.s32 0, %v54
    %v56 = vrot.slane %v47, %v55
    %v57 = vmul.f32 %v51, %v56
    %v58 = vadd.f32 %v45, %v57
    %v59 = vld [vmem:[#allocation2 + $0x11] sm:$0x1]
    %60 = vset.pattern.permute.xlu0 1
    %61 = vperm.xlu0 %60, %v46
    %v62 = vpop.permute.xlu0 %61
    %v64 = vlaneseq
    %v65 = vshrl.u32 %v64, 7
    %v66 = vsub.s32 0, %v65
    %v67 = vrot.slane %v59, %v66
    %v68 = vmul.f32 %v62, %v67
    %v69 = vadd.f32 %v58, %v68
    %v70 = vld [vmem:[#allocation2 + $0x12] sm:$0x1]
    %71 = vset.pattern.permute.xlu0 2
    %72 = vperm.xlu0 %71, %v46
    %v73 = vpop.permute.xlu0 %72
    %v75 = vlaneseq
    %v76 = vshrl.u32 %v75, 7
    %v77 = vsub.s32 0, %v76
    %v78 = vrot.slane %v70, %v77
    %v79 = vmul.f32 %v73, %v78
    %v80 = vadd.f32 %v69, %v79
    %v81 = vld [vmem:[#allocation2 + $0x13] sm:$0x1]
    %82 = vset.pattern.permute.xlu0 3
    %83 = vperm.xlu0 %82, %v46
    %v84 = vpop.permute.xlu0 %83
    %v86 = vlaneseq
    %v87 = vshrl.u32 %v86, 7
    %v88 = vsub.s32 0, %v87
    %v89 = vrot.slane %v81, %v88
    %v90 = vmul.f32 %v84, %v89
    %v91 = vadd.f32 %v80, %v90
    %v92 = vmax.f32 %v91, 0.0
    %vm93 = vcmask 261120
    %v94 = vsel %vm93, %v92, 0.0
    %v95 = vrot.slane %v94, 4
    %v96 = vadd.f32 %v94, %v95
    %v97 = vrot.slane %v96, 2
    %v98 = vadd.f32 %v96, %v97
    %v99 = vrot.slane %v98, 1
    %v100 = vadd.f32 %v98, %v99
    %v101 = vrcp.pop 8.0
    %v102 = vmul.f32 %v100, %v101
    %v103 = vsub.f32 %v92, %v102
    %v104 = vmul.f32 %v103, %v103
    %v105 = vsel %vm93, %v104, 0.0
    %v106 = vrot.slane %v105, 4
    %v107 = vadd.f32 %v105, %v106
    %v108 = vrot.slane %v107, 2
    %v109 = vadd.f32 %v107, %v108
    %v110 = vrot.slane %v109, 1
    %v111 = vadd.f32 %v109, %v110
    %v112 = vmul.f32 %v111, %v101
    %v113 = vld [vmem:[#allocation2 + $0x2] sm:$0x1]
    %v114 = vadd.f32 %v112, 1e-05
    %v115 = vrsqrt.pop %v114
    %v116 = vmul.f32 %v113, %v115
    %v117 = vlaneseq
    %v118 = vshrl.u32 %v117, 7
    %v119 = vsub.s32 0, %v118
    %v120 = vrot.slane %v116, %v119
    %v121 = vmul.f32 %v103, %v120
    %v122 = vld [vmem:[#allocation2 + $0x3] sm:$0x1]
    %v123 = vlaneseq
    %v124 = vshrl.u32 %v123, 7
    %v125 = vsub.s32 0, %v124
    %v126 = vrot.slane %v122, %v125
    %v127 = vadd.f32 %v121, %v126
    %v128 = vld [vmem:[#allocation2 + $0x18] sm:$0xff]
    %v129 = vld [vmem:[#allocation2 + $0x20] sm:$0xff]
    %v130 = vld [vmem:[#allocation2 + $0x28] sm:$0xff]
    %v131 = vld [vmem:[#allocation2 + $0x30] sm:$0xff]
    %v132 = vld [vmem:[#allocation2 + $0x4] sm:$0x1]
    %v133 = vlaneseq
    %v134 = vshrl.u32 %v133, 7
    %v135 = vsub.s32 0, %v134
    %v136 = vrot.slane %v132, %v135
    %v138 = vsel %vm93, %v127, 0
    %140 = vmatprep.subr.mxu0 0.0
    %141 = vmatpush1.msra.mxu0 %v128
    %142 = vmatprep.subr.mxu0 0.0
    %143 = vmatpush1.msra.mxu0 %v129
    %144 = vmatprep.subr.mxu0 0.0
    %145 = vmatpush1.msra.mxu0 %v130
    %146 = vmatprep.subr.mxu0 0.0
    %147 = vmatpush1.msra.mxu0 %v131
    %148 = vmatprep.subr.mxu0 0.0
    %149 = vmatpush1.msra.mxu0 0.0
    %150 = vmatprep.subr.mxu0 0.0
    %151 = vmatpush1.msra.mxu0 0.0
    %152 = vmatprep.subr.mxu0 0.0
    %153 = vmatpush1.msra.mxu0 0.0
    %154 = vmatprep.subr.mxu0 0.0
    %155 = vmatpush1.msra.mxu0 0.0
    %156 = vmatprep.subr.mxu0 0.0
    %157 = vmatpush1.msra.mxu0 0.0
    %158 = vmatprep.subr.mxu0 0.0
    %159 = vmatpush1.msra.mxu0 0.0
    %160 = vmatprep.subr.mxu0 0.0
    %161 = vmatpush1.msra.mxu0 0.0
    %162 = vmatprep.subr.mxu0 0.0
    %163 = vmatpush1.msra.mxu0 0.0
    %164 = vmatprep.subr.mxu0 0.0
    %165 = vmatpush1.msra.mxu0 0.0
    %166 = vmatprep.subr.mxu0 0.0
    %167 = vmatpush1.msra.mxu0 0.0
    %168 = vmatprep.subr.mxu0 0.0
    %169 = vmatpush1.msra.mxu0 0.0
    %170 = vmatprep.subr.mxu0 0.0
    %171 = vmatpush1.msra.mxu0 0.0
    %172 = vmatprep.subr.mxu0 0.0
    %173 = vmatpush1.msra.mxu0 0.0
    %174 = vmatprep.subr.mxu0 0.0
    %175 = vmatpush1.msra.mxu0 0.0
    %176 = vmatprep.subr.mxu0 0.0
    %177 = vmatpush1.msra.mxu0 0.0
    %178 = vmatprep.subr.mxu0 0.0
    %179 = vmatpush1.msra.mxu0 0.0
    %180 = vmatprep.subr.mxu0 0.0
    %181 = vmatpush1.msra.mxu0 0.0
    %182 = vmatprep.subr.mxu0 0.0
    %183 = vmatpush1.msra.mxu0 0.0
    %184 = vmatprep.subr.mxu0 0.0
    %185 = vmatpush1.msra.mxu0 0.0
    %186 = vmatprep.subr.mxu0 0.0
    %187 = vmatpush1.msra.mxu0 0.0
    %188 = vmatprep.subr.mxu0 0.0
    %189 = vmatpush1.msra.mxu0 0.0
    %190 = vmatprep.subr.mxu0 0.0
    %191 = vmatpush1.msra.mxu0 0.0
    %192 = vmatprep.subr.mxu0 0.0
    %193 = vmatpush1.msra.mxu0 0.0
    %194 = vmatprep.subr.mxu0 0.0
    %195 = vmatpush1.msra.mxu0 0.0
    %196 = vmatprep.subr.mxu0 0.0
    %197 = vmatpush1.msra.mxu0 0.0
    %198 = vmatprep.subr.mxu0 0.0
    %199 = vmatpush1.msra.mxu0 0.0
    %200 = vmatprep.subr.mxu0 0.0
    %201 = vmatpush1.msra.mxu0 0.0
    %202 = vmatprep.subr.mxu0 0.0
    %203 = vmatpush1.msra.mxu0 0.0
    %204 = vmatprep.mubr.f32.mxu0 0.0
    %205 = vmatmul.mubr.f32.gmra.mrb[0].mxu0 %v138
    %v206 = vpop.f32.mrb[0].mxu0
    %v207 = vadd.f32 %v136, %v206
    %v208 = vpop.f32.mrb[0].mxu0
    %209 = vdwg.mxu0
    %v210 = vmax.f32 %v207, 0.0
    %v211 = vld [vmem:[#allocation2 + $0x38] sm:$0xff]
    %v212 = vld [vmem:[#allocation2 + $0x40] sm:$0xff]
    %v213 = vld [vmem:[#allocation2 + $0x48] sm:$0xff]
    %v214 = vld [vmem:[#allocation2 + $0x50] sm:$0xff]
    %v215 = vld [vmem:[#allocation2 + $0x5] sm:$0x1]
    %v216 = vlaneseq
    %v217 = vshrl.u32 %v216, 7
    %v218 = vsub.s32 0, %v217
    %v219 = vrot.slane %v215, %v218
    %v221 = vsel %vm93, %v210, 0
    %223 = vmatprep.subr.mxu0 0.0
    %224 = vmatpush1.msra.mxu0 %v211
    %225 = vmatprep.subr.mxu0 0.0
    %226 = vmatpush1.msra.mxu0 %v212
    %227 = vmatprep.subr.mxu0 0.0
    %228 = vmatpush1.msra.mxu0 %v213
    %229 = vmatprep.subr.mxu0 0.0
    %230 = vmatpush1.msra.mxu0 %v214
    %231 = vmatprep.subr.mxu0 0.0
    %232 = vmatpush1.msra.mxu0 0.0
    %233 = vmatprep.subr.mxu0 0.0
    %234 = vmatpush1.msra.mxu0 0.0
    %235 = vmatprep.subr.mxu0 0.0
    %236 = vmatpush1.msra.mxu0 0.0
    %237 = vmatprep.subr.mxu0 0.0
    %238 = vmatpush1.msra.mxu0 0.0
    %239 = vmatprep.subr.mxu0 0.0
    %240 = vmatpush1.msra.mxu0 0.0
    %241 = vmatprep.subr.mxu0 0.0
    %242 = vmatpush1.msra.mxu0 0.0
    %243 = vmatprep.subr.mxu0 0.0
    %244 = vmatpush1.msra.mxu0 0.0
    %245 = vmatprep.subr.mxu0 0.0
    %246 = vmatpush1.msra.mxu0 0.0
    %247 = vmatprep.subr.mxu0 0.0
    %248 = vmatpush1.msra.mxu0 0.0
    %249 = vmatprep.subr.mxu0 0.0
    %250 = vmatpush1.msra.mxu0 0.0
    %251 = vmatprep.subr.mxu0 0.0
    %252 = vmatpush1.msra.mxu0 0.0
    %253 = vmatprep.subr.mxu0 0.0
    %254 = vmatpush1.msra.mxu0 0.0
    %255 = vmatprep.subr.mxu0 0.0
    %256 = vmatpush1.msra.mxu0 0.0
    %257 = vmatprep.subr.mxu0 0.0
    %258 = vmatpush1.msra.mxu0 0.0
    %259 = vmatprep.subr.mxu0 0.0
    %260 = vmatpush1.msra.mxu0 0.0
    %261 = vmatprep.subr.mxu0 0.0
    %262 = vmatpush1.msra.mxu0 0.0
    %263 = vmatprep.subr.mxu0 0.0
    %264 = vmatpush1.msra.mxu0 0.0
    %265 = vmatprep.subr.mxu0 0.0
    %266 = vmatpush1.msra.mxu0 0.0
    %267 = vmatprep.subr.mxu0 0.0
    %268 = vmatpush1.msra.mxu0 0.0
    %269 = vmatprep.subr.mxu0 0.0
    %270 = vmatpush1.msra.mxu0 0.0
    %271 = vmatprep.subr.mxu0 0.0
    %272 = vmatpush1.msra.mxu0 0.0
    %273 = vmatprep.subr.mxu0 0.0
    %274 = vmatpush1.msra.mxu0 0.0
    %275 = vmatprep.subr.mxu0 0.0
    %276 = vmatpush1.msra.mxu0 0.0
    %277 = vmatprep.subr.mxu0 0.0
    %278 = vmatpush1.msra.mxu0 0.0
    %279 = vmatprep.subr.mxu0 0.0
    %280 = vmatpush1.msra.mxu0 0.0
    %281 = vmatprep.subr.mxu0 0.0
    %282 = vmatpush1.msra.mxu0 0.0
    %283 = vmatprep.subr.mxu0 0.0
    %284 = vmatpush1.msra.mxu0 0.0
    %285 = vmatprep.subr.mxu0 0.0
    %286 = vmatpush1.msra.mxu0 0.0
    %287 = vmatprep.mubr.f32.mxu0 0.0
    %288 = vmatmul.mubr.f32.gmra.mrb[0].mxu0 %v221
    %v289 = vpop.f32.mrb[0].mxu0
    %v290 = vadd.f32 %v219, %v289
    %v291 = vpop.f32.mrb[0].mxu0
    %292 = vdwg.mxu0
    %v293 = vmax.f32 %v290, 0.0
    %v294 = vld [vmem:[#allocation2 + $0x58] sm:$0xff]
    %v295 = vld [vmem:[#allocation2 + $0x60] sm:$0xff]
    %v296 = vld [vmem:[#allocation2 + $0x68] sm:$0xff]
    %v297 = vld [vmem:[#allocation2 + $0x70] sm:$0xff]
    %v298 = vld [vmem:[#allocation2 + $0x6] sm:$0x1]
    %v299 = vlaneseq
    %v300 = vshrl.u32 %v299, 7
    %v301 = vsub.s32 0, %v300
    %v302 = vrot.slane %v298, %v301
    %v303 = vmul.f32 %v33, %v302
    %v305 = vsel %vm93, %v293, 0
    %307 = vmatprep.subr.mxu0 0.0
    %308 = vmatpush1.msra.mxu0 %v294
    %309 = vmatprep.subr.mxu0 0.0
    %310 = vmatpush1.msra.mxu0 %v295
    %311 = vmatprep.subr.mxu0 0.0
    %312 = vmatpush1.msra.mxu0 %v296
    %313 = vmatprep.subr.mxu0 0.0
    %314 = vmatpush1.msra.mxu0 %v297
    %315 = vmatprep.subr.mxu0 0.0
    %316 = vmatpush1.msra.mxu0 0.0
    %317 = vmatprep.subr.mxu0 0.0
    %318 = vmatpush1.msra.mxu0 0.0
    %319 = vmatprep.subr.mxu0 0.0
    %320 = vmatpush1.msra.mxu0 0.0
    %321 = vmatprep.subr.mxu0 0.0
    %322 = vmatpush1.msra.mxu0 0.0
    %323 = vmatprep.subr.mxu0 0.0
    %324 = vmatpush1.msra.mxu0 0.0
    %325 = vmatprep.subr.mxu0 0.0
    %326 = vmatpush1.msra.mxu0 0.0
    %327 = vmatprep.subr.mxu0 0.0
    %328 = vmatpush1.msra.mxu0 0.0
    %329 = vmatprep.subr.mxu0 0.0
    %330 = vmatpush1.msra.mxu0 0.0
    %331 = vmatprep.subr.mxu0 0.0
    %332 = vmatpush1.msra.mxu0 0.0
    %333 = vmatprep.subr.mxu0 0.0
    %334 = vmatpush1.msra.mxu0 0.0
    %335 = vmatprep.subr.mxu0 0.0
    %336 = vmatpush1.msra.mxu0 0.0
    %337 = vmatprep.subr.mxu0 0.0
    %338 = vmatpush1.msra.mxu0 0.0
    %339 = vmatprep.subr.mxu0 0.0
    %340 = vmatpush1.msra.mxu0 0.0
    %341 = vmatprep.subr.mxu0 0.0
    %342 = vmatpush1.msra.mxu0 0.0
    %343 = vmatprep.subr.mxu0 0.0
    %344 = vmatpush1.msra.mxu0 0.0
    %345 = vmatprep.subr.mxu0 0.0
    %346 = vmatpush1.msra.mxu0 0.0
    %347 = vmatprep.subr.mxu0 0.0
    %348 = vmatpush1.msra.mxu0 0.0
    %349 = vmatprep.subr.mxu0 0.0
    %350 = vmatpush1.msra.mxu0 0.0
    %351 = vmatprep.subr.mxu0 0.0
    %352 = vmatpush1.msra.mxu0 0.0
    %353 = vmatprep.subr.mxu0 0.0
    %354 = vmatpush1.msra.mxu0 0.0
    %355 = vmatprep.subr.mxu0 0.0
    %356 = vmatpush1.msra.mxu0 0.0
    %357 = vmatprep.subr.mxu0 0.0
    %358 = vmatpush1.msra.mxu0 0.0
    %359 = vmatprep.subr.mxu0 0.0
    %360 = vmatpush1.msra.mxu0 0.0
    %361 = vmatprep.subr.mxu0 0.0
    %362 = vmatpush1.msra.mxu0 0.0
    %363 = vmatprep.subr.mxu0 0.0
    %364 = vmatpush1.msra.mxu0 0.0
    %365 = vmatprep.subr.mxu0 0.0
    %366 = vmatpush1.msra.mxu0 0.0
    %367 = vmatprep.subr.mxu0 0.0
    %368 = vmatpush1.msra.mxu0 0.0
    %369 = vmatprep.subr.mxu0 0.0
    %370 = vmatpush1.msra.mxu0 0.0
    %371 = vmatprep.mubr.f32.mxu0 0.0
    %372 = vmatmul.mubr.f32.gmra.mrb[0].mxu0 %v305
    %v373 = vpop.f32.mrb[0].mxu0
    %v374 = vadd.f32 %v303, %v373
    %v375 = vpop.f32.mrb[0].mxu0
    %376 = vdwg.mxu0
    %v377 = vld [vmem:[#allocation2 + $0x7] sm:$0x1]
    %v378 = vlaneseq
    %v379 = vshrl.u32 %v378, 7
    %v380 = vsub.s32 0, %v379
    %v381 = vrot.slane %v377, %v380
    %v382 = vadd.f32 %v374, %v381
    %v383 = vmax.f32 %v382, 0.0
    %v384 = vmul.f32 %v383, %v382
    %v385 = vld [vmem:[#allocation2 + $0x78] sm:$0xff]
    %v386 = vld [vmem:[#allocation2 + $0x80] sm:$0xff]
    %v387 = vld [vmem:[#allocation2 + $0x88] sm:$0xff]
    %v388 = vld [vmem:[#allocation2 + $0x90] sm:$0xff]
    %v389 = vld [vmem:[#allocation2 + $0x8] sm:$0x1]
    %v390 = vlaneseq
    %v391 = vshrl.u32 %v390, 7
    %v392 = vsub.s32 0, %v391
    %v393 = vrot.slane %v389, %v392
    %v395 = vsel %vm93, %v384, 0
    %397 = vmatprep.subr.mxu0 0.0
    %398 = vmatpush1.msra.mxu0 %v385
    %399 = vmatprep.subr.mxu0 0.0
    %400 = vmatpush1.msra.mxu0 %v386
    %401 = vmatprep.subr.mxu0 0.0
    %402 = vmatpush1.msra.mxu0 %v387
    %403 = vmatprep.subr.mxu0 0.0
    %404 = vmatpush1.msra.mxu0 %v388
    %405 = vmatprep.subr.mxu0 0.0
    %406 = vmatpush1.msra.mxu0 0.0
    %407 = vmatprep.subr.mxu0 0.0
    %408 = vmatpush1.msra.mxu0 0.0
    %409 = vmatprep.subr.mxu0 0.0
    %410 = vmatpush1.msra.mxu0 0.0
    %411 = vmatprep.subr.mxu0 0.0
    %412 = vmatpush1.msra.mxu0 0.0
    %413 = vmatprep.subr.mxu0 0.0
    %414 = vmatpush1.msra.mxu0 0.0
    %415 = vmatprep.subr.mxu0 0.0
    %416 = vmatpush1.msra.mxu0 0.0
    %417 = vmatprep.subr.mxu0 0.0
    %418 = vmatpush1.msra.mxu0 0.0
    %419 = vmatprep.subr.mxu0 0.0
    %420 = vmatpush1.msra.mxu0 0.0
    %421 = vmatprep.subr.mxu0 0.0
    %422 = vmatpush1.msra.mxu0 0.0
    %423 = vmatprep.subr.mxu0 0.0
    %424 = vmatpush1.msra.mxu0 0.0
    %425 = vmatprep.subr.mxu0 0.0
    %426 = vmatpush1.msra.mxu0 0.0
    %427 = vmatprep.subr.mxu0 0.0
    %428 = vmatpush1.msra.mxu0 0.0
    %429 = vmatprep.subr.mxu0 0.0
    %430 = vmatpush1.msra.mxu0 0.0
    %431 = vmatprep.subr.mxu0 0.0
    %432 = vmatpush1.msra.mxu0 0.0
    %433 = vmatprep.subr.mxu0 0.0
    %434 = vmatpush1.msra.mxu0 0.0
    %435 = vmatprep.subr.mxu0 0.0
    %436 = vmatpush1.msra.mxu0 0.0
    %437 = vmatprep.subr.mxu0 0.0
    %438 = vmatpush1.msra.mxu0 0.0
    %439 = vmatprep.subr.mxu0 0.0
    %440 = vmatpush1.msra.mxu0 0.0
    %441 = vmatprep.subr.mxu0 0.0
    %442 = vmatpush1.msra.mxu0 0.0
    %443 = vmatprep.subr.mxu0 0.0
    %444 = vmatpush1.msra.mxu0 0.0
    %445 = vmatprep.subr.mxu0 0.0
    %446 = vmatpush1.msra.mxu0 0.0
    %447 = vmatprep.subr.mxu0 0.0
    %448 = vmatpush1.msra.mxu0 0.0
    %449 = vmatprep.subr.mxu0 0.0
    %450 = vmatpush1.msra.mxu0 0.0
    %451 = vmatprep.subr.mxu0 0.0
    %452 = vmatpush1.msra.mxu0 0.0
    %453 = vmatprep.subr.mxu0 0.0
    %454 = vmatpush1.msra.mxu0 0.0
    %455 = vmatprep.subr.mxu0 0.0
    %456 = vmatpush1.msra.mxu0 0.0
    %457 = vmatprep.subr.mxu0 0.0
    %458 = vmatpush1.msra.mxu0 0.0
    %459 = vmatprep.subr.mxu0 0.0
    %460 = vmatpush1.msra.mxu0 0.0
    %461 = vmatprep.mubr.f32.mxu0 0.0
    %462 = vmatmul.mubr.f32.gmra.mrb[0].mxu0 %v395
    %v463 = vpop.f32.mrb[0].mxu0
    %v464 = vadd.f32 %v393, %v463
    %v465 = vpop.f32.mrb[0].mxu0
    %466 = vdwg.mxu0
    %v467 = vmax.f32 %v464, 0.0
    %v468 = vld [vmem:[#allocation2 + $0x98] sm:$0xff]
    %v469 = vld [vmem:[#allocation2 + $0xa0] sm:$0xff]
    %v470 = vld [vmem:[#allocation2 + $0xa8] sm:$0xff]
    %v471 = vld [vmem:[#allocation2 + $0xb0] sm:$0xff]
    %v472 = vld [vmem:[#allocation2 + $0x9] sm:$0x1]
    %v473 = vlaneseq
    %v474 = vshrl.u32 %v473, 7
    %v475 = vsub.s32 0, %v474
    %v476 = vrot.slane %v472, %v475
    %v478 = vsel %vm93, %v467, 0
    %480 = vmatprep.subr.mxu0 0.0
    %481 = vmatpush1.msra.mxu0 %v468
    %482 = vmatprep.subr.mxu0 0.0
    %483 = vmatpush1.msra.mxu0 %v469
    %484 = vmatprep.subr.mxu0 0.0
    %485 = vmatpush1.msra.mxu0 %v470
    %486 = vmatprep.subr.mxu0 0.0
    %487 = vmatpush1.msra.mxu0 %v471
    %488 = vmatprep.subr.mxu0 0.0
    %489 = vmatpush1.msra.mxu0 0.0
    %490 = vmatprep.subr.mxu0 0.0
    %491 = vmatpush1.msra.mxu0 0.0
    %492 = vmatprep.subr.mxu0 0.0
    %493 = vmatpush1.msra.mxu0 0.0
    %494 = vmatprep.subr.mxu0 0.0
    %495 = vmatpush1.msra.mxu0 0.0
    %496 = vmatprep.subr.mxu0 0.0
    %497 = vmatpush1.msra.mxu0 0.0
    %498 = vmatprep.subr.mxu0 0.0
    %499 = vmatpush1.msra.mxu0 0.0
    %500 = vmatprep.subr.mxu0 0.0
    %501 = vmatpush1.msra.mxu0 0.0
    %502 = vmatprep.subr.mxu0 0.0
    %503 = vmatpush1.msra.mxu0 0.0
    %504 = vmatprep.subr.mxu0 0.0
    %505 = vmatpush1.msra.mxu0 0.0
    %506 = vmatprep.subr.mxu0 0.0
    %507 = vmatpush1.msra.mxu0 0.0
    %508 = vmatprep.subr.mxu0 0.0
    %509 = vmatpush1.msra.mxu0 0.0
    %510 = vmatprep.subr.mxu0 0.0
    %511 = vmatpush1.msra.mxu0 0.0
    %512 = vmatprep.subr.mxu0 0.0
    %513 = vmatpush1.msra.mxu0 0.0
    %514 = vmatprep.subr.mxu0 0.0
    %515 = vmatpush1.msra.mxu0 0.0
    %516 = vmatprep.subr.mxu0 0.0
    %517 = vmatpush1.msra.mxu0 0.0
    %518 = vmatprep.subr.mxu0 0.0
    %519 = vmatpush1.msra.mxu0 0.0
    %520 = vmatprep.subr.mxu0 0.0
    %521 = vmatpush1.msra.mxu0 0.0
    %522 = vmatprep.subr.mxu0 0.0
    %523 = vmatpush1.msra.mxu0 0.0
    %524 = vmatprep.subr.mxu0 0.0
    %525 = vmatpush1.msra.mxu0 0.0
    %526 = vmatprep.subr.mxu0 0.0
    %527 = vmatpush1.msra.mxu0 0.0
    %528 = vmatprep.subr.mxu0 0.0
    %529 = vmatpush1.msra.mxu0 0.0
    %530 = vmatprep.subr.mxu0 0.0
    %531 = vmatpush1.msra.mxu0 0.0
    %532 = vmatprep.subr.mxu0 0.0
    %533 = vmatpush1.msra.mxu0 0.0
    %534 = vmatprep.subr.mxu0 0.0
    %535 = vmatpush1.msra.mxu0 0.0
    %536 = vmatprep.subr.mxu0 0.0
    %537 = vmatpush1.msra.mxu0 0.0
    %538 = vmatprep.subr.mxu0 0.0
    %539 = vmatpush1.msra.mxu0 0.0
    %540 = vmatprep.subr.mxu0 0.0
    %541 = vmatpush1.msra.mxu0 0.0
    %542 = vmatprep.subr.mxu0 0.0
    %543 = vmatpush1.msra.mxu0 0.0
    %544 = vmatprep.mubr.f32.mxu0 0.0
    %545 = vmatmul.mubr.f32.gmra.mrb[0].mxu0 %v478
    %v546 = vpop.f32.mrb[0].mxu0
    %v547 = vadd.f32 %v476, %v546
    %v548 = vpop.f32.mrb[0].mxu0
    %549 = vdwg.mxu0
    %v550 = vmax.f32 %v547, 0.0
    %v551 = vld [vmem:[#allocation2 + $0xb8] sm:$0xff]
    %v552 = vld [vmem:[#allocation2 + $0xc0] sm:$0xff]
    %v553 = vld [vmem:[#allocation2 + $0xc8] sm:$0xff]
    %v554 = vld [vmem:[#allocation2 + $0xd0] sm:$0xff]
    %v555 = vld [vmem:[#allocation2 + $0xa] sm:$0x1]
    %v556 = vlaneseq
    %v557 = vshrl.u32 %v556, 7
    %v558 = vsub.s32 0, %v557
    %v559 = vrot.slane %v555, %v558
    %v560 = vmul.f32 %v33, %v559
    %v562 = vsel %vm93, %v550, 0
    %564 = vmatprep.subr.mxu0 0.0
    %565 = vmatpush1.msra.mxu0 %v551
    %566 = vmatprep.subr.mxu0 0.0
    %567 = vmatpush1.msra.mxu0 %v552
    %568 = vmatprep.subr.mxu0 0.0
    %569 = vmatpush1.msra.mxu0 %v553
    %570 = vmatprep.subr.mxu0 0.0
    %571 = vmatpush1.msra.mxu0 %v554
    %572 = vmatprep.subr.mxu0 0.0
    %573 = vmatpush1.msra.mxu0 0.0
    %574 = vmatprep.subr.mxu0 0.0
    %575 = vmatpush1.msra.mxu0 0.0
    %576 = vmatprep.subr.mxu0 0.0
    %577 = vmatpush1.msra.mxu0 0.0
    %578 = vmatprep.subr.mxu0 0.0
    %579 = vmatpush1.msra.mxu0 0.0
    %580 = vmatprep.subr.mxu0 0.0
    %581 = vmatpush1.msra.mxu0 0.0
    %582 = vmatprep.subr.mxu0 0.0
    %583 = vmatpush1.msra.mxu0 0.0
    %584 = vmatprep.subr.mxu0 0.0
    %585 = vmatpush1.msra.mxu0 0.0
    %586 = vmatprep.subr.mxu0 0.0
    %587 = vmatpush1.msra.mxu0 0.0
    %588 = vmatprep.subr.mxu0 0.0
    %589 = vmatpush1.msra.mxu0 0.0
    %590 = vmatprep.subr.mxu0 0.0
    %591 = vmatpush1.msra.mxu0 0.0
    %592 = vmatprep.subr.mxu0 0.0
    %593 = vmatpush1.msra.mxu0 0.0
    %594 = vmatprep.subr.mxu0 0.0
    %595 = vmatpush1.msra.mxu0 0.0
    %596 = vmatprep.subr.mxu0 0.0
    %597 = vmatpush1.msra.mxu0 0.0
    %598 = vmatprep.subr.mxu0 0.0
    %599 = vmatpush1.msra.mxu0 0.0
    %600 = vmatprep.subr.mxu0 0.0
    %601 = vmatpush1.msra.mxu0 0.0
    %602 = vmatprep.subr.mxu0 0.0
    %603 = vmatpush1.msra.mxu0 0.0
    %604 = vmatprep.subr.mxu0 0.0
    %605 = vmatpush1.msra.mxu0 0.0
    %606 = vmatprep.subr.mxu0 0.0
    %607 = vmatpush1.msra.mxu0 0.0
    %608 = vmatprep.subr.mxu0 0.0
    %609 = vmatpush1.msra.mxu0 0.0
    %610 = vmatprep.subr.mxu0 0.0
    %611 = vmatpush1.msra.mxu0 0.0
    %612 = vmatprep.subr.mxu0 0.0
    %613 = vmatpush1.msra.mxu0 0.0
    %614 = vmatprep.subr.mxu0 0.0
    %615 = vmatpush1.msra.mxu0 0.0
    %616 = vmatprep.subr.mxu0 0.0
    %617 = vmatpush1.msra.mxu0 0.0
    %618 = vmatprep.subr.mxu0 0.0
    %619 = vmatpush1.msra.mxu0 0.0
    %620 = vmatprep.subr.mxu0 0.0
    %621 = vmatpush1.msra.mxu0 0.0
    %622 = vmatprep.subr.mxu0 0.0
    %623 = vmatpush1.msra.mxu0 0.0
    %624 = vmatprep.subr.mxu0 0.0
    %625 = vmatpush1.msra.mxu0 0.0
    %626 = vmatprep.subr.mxu0 0.0
    %627 = vmatpush1.msra.mxu0 0.0
    %628 = vmatprep.mubr.f32.mxu0 0.0
    %629 = vmatmul.mubr.f32.gmra.mrb[0].mxu0 %v562
    %v630 = vpop.f32.mrb[0].mxu0
    %v631 = vadd.f32 %v560, %v630
    %v632 = vpop.f32.mrb[0].mxu0
    %633 = vdwg.mxu0
    %v634 = vld [vmem:[#allocation2 + $0xb] sm:$0x1]
    %v635 = vlaneseq
    %v636 = vshrl.u32 %v635, 7
    %v637 = vsub.s32 0, %v636
    %v638 = vrot.slane %v634, %v637
    %v639 = vadd.f32 %v631, %v638
    %640 = vst [vmem:[%s3] sm:$0xff] %v639
    // Predicated region
    $region18: #{toy_conditional_model.1} parent=1 // pred_check
      _
    $region19: #{toy_conditional_model.1} parent=1 // pred_check_branch
      %642 = sbr.rel (0) target = $region21
    $region20: #{toy_conditional_model.1} parent=1 // pred_region
      _
    $region21: #{toy_conditional_model.1} parent=1 // pred_fallthru
      _
    // Predicated region
    $region22: #{toy_conditional_model.1} parent=1 // pred_check
      _
    $region23: #{toy_conditional_model.1} parent=1 // pred_check_branch
      %644 = sbr.rel (0) target = $region25
    $region24: #{toy_conditional_model.1} parent=1 // pred_region
      _
    $region25: #{toy_conditional_model.1} parent=1 // pred_fallthru
      _
    %645 = vsyncpa [#allocation3], 1

</llo_original>
